<compile_context>
chip_gen: v6e
topology: v6e:2x2x1
jax: 0.10.0
libtpu: 0.0.40
codegen_flags: <defaults>
</compile_context>

<pallas_src>
import functools

import jax
import jax.numpy as jnp
from jax.experimental import pallas as pl
from jax.experimental.pallas import tpu as pltpu

EPS = 1e-6  # torch.nn.functional.pairwise_distance default eps


@functools.lru_cache(maxsize=None)
def _vmem_budgets():
    """(buffer budget, scoped-VMEM limit) in bytes, generation aware."""
    cap = 64 * 1024 * 1024  # conservative fallback == v7x physical VMEM
    try:
        info = pltpu.get_tpu_info()
        cap = int(getattr(info, "vmem_capacity_bytes", cap)) or cap
    except Exception:
        pass
    limit = (3 * cap) // 4   # ~96 MiB on v5e/v6e, ~48 MiB on v7x
    budget = cap // 2        # ~64 MiB on v5e/v6e, ~32 MiB on v7x
    return budget, limit


def _loss_kernel(in1_ref, out1_ref, in2_ref, out2_ref, sos1_ref, sos2_ref,
                 acc1, acc2, *, tile_d, d_total, need_mask):
    """Grid: (row blocks ["parallel"], feature tiles ["arbitrary"]).

    acc1/acc2: (tr, 1) f32 VMEM scratch holding the running per-row sum of
    squares of the current row block; re-initialised at k == 0 and flushed to
    the resident output block at k == last.
    """
    k = pl.program_id(1)
    nk = pl.num_programs(1)

    @pl.when(k == 0)
    def _():
        acc1[...] = jnp.zeros_like(acc1)
        acc2[...] = jnp.zeros_like(acc2)

    d1 = in1_ref[...].astype(jnp.float32) - out1_ref[...].astype(jnp.float32) + EPS
    d2 = in2_ref[...].astype(jnp.float32) - out2_ref[...].astype(jnp.float32) + EPS
    sq1 = d1 * d1
    sq2 = d2 * d2

    if need_mask:
        # Only the final feature tile is ragged: keep the steady state free of
        # the iota/compare/select mask (VALU headroom for bf16 inputs / v7x).
        @pl.when(k < nk - 1)
        def _():
            acc1[...] += jnp.sum(sq1, axis=-1, keepdims=True)
            acc2[...] += jnp.sum(sq2, axis=-1, keepdims=True)

        @pl.when(k == nk - 1)
        def _():
            lane = jax.lax.broadcasted_iota(jnp.int32, sq1.shape, 1)
            valid = lane < (d_total - k * tile_d)
            acc1[...] += jnp.sum(jnp.where(valid, sq1, 0.0), axis=-1, keepdims=True)
            acc2[...] += jnp.sum(jnp.where(valid, sq2, 0.0), axis=-1, keepdims=True)
    else:
        acc1[...] += jnp.sum(sq1, axis=-1, keepdims=True)
        acc2[...] += jnp.sum(sq2, axis=-1, keepdims=True)

    @pl.when(k == nk - 1)
    def _():
        sos1_ref[...] = acc1[...]
        sos2_ref[...] = acc2[...]


@jax.jit
def loss_generative(input1, input2, output1, output2):
    """Pallas implementation of LossGenerative.forward. Returns a f32 scalar."""
    B = input1.shape[0]
    D = 1
    for s in input1.shape[1:]:
        D *= s

    # Sublane packing: (B, D) -> (B*pack, D/pack), a free row-major reshape
    # that preserves per-row sums. Aim for >= 16 rows so the row axis can be
    # split into two blocks (one per v7x TensorCore).
    pack = 1
    if B < 16:
        for p in (16, 8, 4, 2):
            if D % p == 0 and (D // p) >= 128:
                pack = p
                break
    Bp, Dp = B * pack, D // pack

    i1 = jnp.reshape(input1, (Bp, Dp))
    i2 = jnp.reshape(input2, (Bp, Dp))
    o1 = jnp.reshape(output1, (Bp, Dp))
    o2 = jnp.reshape(output2, (Bp, Dp))

    vmem_budget, vmem_limit = _vmem_budgets()
    isz_sum = sum(jnp.dtype(x.dtype).itemsize for x in (i1, i2, o1, o2))

    # Row blocking: 2-way split when cleanly possible (v7x megacore axis);
    # shrink further only if even a 128-wide feature tile would blow the
    # VMEM budget (very large Bp). Row blocks are multiples of 8 (or full Bp).
    if Bp >= 16 and Bp % 16 == 0:
        tr = Bp // 2
    else:
        tr = Bp
    while tr > 8 and 2 * tr * isz_sum * 128 > vmem_budget:
        tr = max(8, ((tr // 2) + 7) // 8 * 8)
    n_r = pl.cdiv(Bp, tr)

    # Feature tile: 4 input streams x 2 pipeline buffers per column of a row
    # block (accumulators are only (tr, 1) f32 now -> negligible).
    per_col = 2 * tr * isz_sum
    td_cap = max(128, (vmem_budget // per_col) // 128 * 128)
    td = Dp if Dp <= td_cap else td_cap
    n_k = pl.cdiv(Dp, td)
    need_mask = (Dp % td) != 0

    in_spec = pl.BlockSpec((tr, td), lambda r, k: (r, k))
    out_spec = pl.BlockSpec((tr, 1), lambda r, k: (r, 0))

    kernel = functools.partial(_loss_kernel, tile_d=td, d_total=Dp,
                               need_mask=need_mask)

    bytes_accessed = sum(x.size * jnp.dtype(x.dtype).itemsize
                         for x in (i1, i2, o1, o2)) + 2 * Bp * 4
    cost = pl.CostEstimate(flops=8 * B * D, transcendentals=0,
                           bytes_accessed=bytes_accessed)

    sos1, sos2 = pl.pallas_call(
        kernel,
        out_shape=(jax.ShapeDtypeStruct((Bp, 1), jnp.float32),
                   jax.ShapeDtypeStruct((Bp, 1), jnp.float32)),
        grid_spec=pltpu.PrefetchScalarGridSpec(
            num_scalar_prefetch=0,
            grid=(n_r, n_k),
            in_specs=[in_spec, in_spec, in_spec, in_spec],
            out_specs=[out_spec, out_spec],
            scratch_shapes=[
                pltpu.VMEM((tr, 1), jnp.float32),
                pltpu.VMEM((tr, 1), jnp.float32),
            ],
        ),
        compiler_params=pltpu.CompilerParams(
            dimension_semantics=("parallel", "arbitrary"),
            vmem_limit_bytes=vmem_limit,
        ),
        cost_estimate=cost,
    )(i1, o1, i2, o2)

    # TODO(synk): fold this tiny epilogue (pack fold + sqrt + sum) into the
    # final grid step to shave dispatch latency on very small invocations.
    sos1 = jnp.sum(jnp.reshape(sos1, (B, pack)), axis=-1)
    sos2 = jnp.sum(jnp.reshape(sos2, (B, pack)), axis=-1)
    return jnp.sum(jnp.sqrt(sos1) + jnp.sqrt(sos2))


def _reference(input1, input2, output1, output2):
    """Plain-JAX reference matching torch semantics."""
    def flat(x):
        return jnp.reshape(x, (x.shape[0], -1)).astype(jnp.float32)
    i1, i2, o1, o2 = flat(input1), flat(input2), flat(output1), flat(output2)
    d1 = jnp.sqrt(jnp.sum((i1 - o1 + EPS) ** 2, axis=1))
    d2 = jnp.sqrt(jnp.sum((i2 - o2 + EPS) ** 2, axis=1))
    return jnp.sum(d1 + d2)


if __name__ == "__main__":
    key = jax.random.PRNGKey(0)
    k1, k2, k3, k4 = jax.random.split(key, 4)

    B, C, H, W = 2, 4, 16, 16  # NCHW, flattened to (B, C*H*W) = (2, 1024)
    input1 = jax.random.normal(k1, (B, C, H, W), dtype=jnp.float32)
    input2 = jax.random.normal(k2, (B, C, H, W), dtype=jnp.float32)
    output1 = jax.random.normal(k3, (B, C, H, W), dtype=jnp.float32)
    output2 = jax.random.normal(k4, (B, C, H, W), dtype=jnp.float32)

    result = loss_generative(input1, input2, output1, output2)
    jax.block_until_ready(result)

    ref = _reference(input1, input2, output1, output2)
    assert jnp.allclose(result, ref, rtol=1e-5, atol=1e-4), (result, ref)

    print("KERNEL_OK")
</pallas_src>

<mosaic_0001>
module attributes {stable_mosaic.version = 11 : i64} {
  func.func @_loss_kernel(%arg0: i32, %arg1: i32, %arg2: memref<8x128xf32, #tpu.memory_space<vmem>>, %arg3: memref<8x128xf32, #tpu.memory_space<vmem>>, %arg4: memref<8x128xf32, #tpu.memory_space<vmem>>, %arg5: memref<8x128xf32, #tpu.memory_space<vmem>>, %arg6: memref<8x1xf32, #tpu.memory_space<vmem>>, %arg7: memref<8x1xf32, #tpu.memory_space<vmem>>, %arg8: memref<8x1xf32, #tpu.memory_space<vmem>>, %arg9: memref<8x1xf32, #tpu.memory_space<vmem>>) attributes {dimension_semantics = [#tpu.dimension_semantics<parallel>, #tpu.dimension_semantics<arbitrary>], iteration_bounds = array<i64: 2, 1>, scalar_prefetch = 0 : i64, scratch_operands = 2 : i64, tpu.core_type = #tpu.core_type<tc>, window_params = [{transform_indices = @transform_0, window_bounds = array<i64: 8, 128>}, {transform_indices = @transform_1, window_bounds = array<i64: 8, 128>}, {transform_indices = @transform_2, window_bounds = array<i64: 8, 128>}, {transform_indices = @transform_3, window_bounds = array<i64: 8, 128>}, {transform_indices = @transform_4, window_bounds = array<i64: 8, 1>}, {transform_indices = @transform_5, window_bounds = array<i64: 8, 1>}]} {
    %c0_i32 = arith.constant 0 : i32
    %0 = arith.cmpi eq, %arg1, %c0_i32 : i32
    %1 = arith.extui %0 : i1 to i32
    %c0_i32_0 = arith.constant 0 : i32
    %2 = arith.cmpi ne, %1, %c0_i32_0 : i32
    scf.if %2 {
      %cst_21 = arith.constant 0.000000e+00 : f32
      %28 = vector.broadcast %cst_21 : f32 to vector<8x1xf32>
      %c0_22 = arith.constant 0 : index
      %c0_23 = arith.constant 0 : index
      %29 = vector.load %arg8[%c0_22, %c0_23] : memref<8x1xf32, #tpu.memory_space<vmem>>, vector<8x1xf32>
      tpu.vector_store %arg8[%c0_22, %c0_23], %28 {strides = array<i32>} : memref<8x1xf32, #tpu.memory_space<vmem>>, vector<8x1xf32>,
      %cst_24 = arith.constant 0.000000e+00 : f32
      %30 = vector.broadcast %cst_24 : f32 to vector<8x1xf32>
      %c0_25 = arith.constant 0 : index
      %c0_26 = arith.constant 0 : index
      %31 = vector.load %arg9[%c0_25, %c0_26] : memref<8x1xf32, #tpu.memory_space<vmem>>, vector<8x1xf32>
      tpu.vector_store %arg9[%c0_25, %c0_26], %30 {strides = array<i32>} : memref<8x1xf32, #tpu.memory_space<vmem>>, vector<8x1xf32>,
    } else {
    }
    %c0 = arith.constant 0 : index
    %c0_1 = arith.constant 0 : index
    %3 = vector.load %arg2[%c0, %c0_1] : memref<8x128xf32, #tpu.memory_space<vmem>>, vector<8x128xf32>
    %c0_2 = arith.constant 0 : index
    %c0_3 = arith.constant 0 : index
    %4 = vector.load %arg3[%c0_2, %c0_3] : memref<8x128xf32, #tpu.memory_space<vmem>>, vector<8x128xf32>
    %5 = arith.subf %3, %4 : vector<8x128xf32>
    %cst = arith.constant 9.99999997E-7 : f32
    %6 = vector.broadcast %cst : f32 to vector<8x128xf32>
    %7 = arith.addf %5, %6 : vector<8x128xf32>
    %c0_4 = arith.constant 0 : index
    %c0_5 = arith.constant 0 : index
    %8 = vector.load %arg4[%c0_4, %c0_5] : memref<8x128xf32, #tpu.memory_space<vmem>>, vector<8x128xf32>
    %c0_6 = arith.constant 0 : index
    %c0_7 = arith.constant 0 : index
    %9 = vector.load %arg5[%c0_6, %c0_7] : memref<8x128xf32, #tpu.memory_space<vmem>>, vector<8x128xf32>
    %10 = arith.subf %8, %9 : vector<8x128xf32>
    %cst_8 = arith.constant 9.99999997E-7 : f32
    %11 = vector.broadcast %cst_8 : f32 to vector<8x128xf32>
    %12 = arith.addf %10, %11 : vector<8x128xf32>
    %13 = arith.mulf %7, %7 : vector<8x128xf32>
    %14 = arith.mulf %12, %12 : vector<8x128xf32>
    %c0_9 = arith.constant 0 : index
    %c0_10 = arith.constant 0 : index
    %15 = vector.load %arg8[%c0_9, %c0_10] : memref<8x1xf32, #tpu.memory_space<vmem>>, vector<8x1xf32>
    %cst_11 = arith.constant dense<0.000000e+00> : vector<8xf32>
    %16 = vector.multi_reduction <add>, %13, %cst_11 [1] : vector<8x128xf32> to vector<8xf32>
    %17 = vector.shape_cast %16 : vector<8xf32> to vector<8x1xf32>
    %18 = arith.addf %15, %17 : vector<8x1xf32>
    %c0_12 = arith.constant 0 : index
    %c0_13 = arith.constant 0 : index
    %19 = vector.load %arg8[%c0_12, %c0_13] : memref<8x1xf32, #tpu.memory_space<vmem>>, vector<8x1xf32>
    tpu.vector_store %arg8[%c0_12, %c0_13], %18 {strides = array<i32>} : memref<8x1xf32, #tpu.memory_space<vmem>>, vector<8x1xf32>,
    %c0_14 = arith.constant 0 : index
    %c0_15 = arith.constant 0 : index
    %20 = vector.load %arg9[%c0_14, %c0_15] : memref<8x1xf32, #tpu.memory_space<vmem>>, vector<8x1xf32>
    %cst_16 = arith.constant dense<0.000000e+00> : vector<8xf32>
    %21 = vector.multi_reduction <add>, %14, %cst_16 [1] : vector<8x128xf32> to vector<8xf32>
    %22 = vector.shape_cast %21 : vector<8xf32> to vector<8x1xf32>
    %23 = arith.addf %20, %22 : vector<8x1xf32>
    %c0_17 = arith.constant 0 : index
    %c0_18 = arith.constant 0 : index
    %24 = vector.load %arg9[%c0_17, %c0_18] : memref<8x1xf32, #tpu.memory_space<vmem>>, vector<8x1xf32>
    tpu.vector_store %arg9[%c0_17, %c0_18], %23 {strides = array<i32>} : memref<8x1xf32, #tpu.memory_space<vmem>>, vector<8x1xf32>,
    %c0_i32_19 = arith.constant 0 : i32
    %25 = arith.cmpi eq, %arg1, %c0_i32_19 : i32
    %26 = arith.extui %25 : i1 to i32
    %c0_i32_20 = arith.constant 0 : i32
    %27 = arith.cmpi ne, %26, %c0_i32_20 : i32
    scf.if %27 {
      %c0_21 = arith.constant 0 : index
      %c0_22 = arith.constant 0 : index
      %28 = vector.load %arg8[%c0_21, %c0_22] : memref<8x1xf32, #tpu.memory_space<vmem>>, vector<8x1xf32>
      %c0_23 = arith.constant 0 : index
      %c0_24 = arith.constant 0 : index
      %29 = vector.load %arg6[%c0_23, %c0_24] : memref<8x1xf32, #tpu.memory_space<vmem>>, vector<8x1xf32>
      tpu.vector_store %arg6[%c0_23, %c0_24], %28 {strides = array<i32>} : memref<8x1xf32, #tpu.memory_space<vmem>>, vector<8x1xf32>,
      %c0_25 = arith.constant 0 : index
      %c0_26 = arith.constant 0 : index
      %30 = vector.load %arg9[%c0_25, %c0_26] : memref<8x1xf32, #tpu.memory_space<vmem>>, vector<8x1xf32>
      %c0_27 = arith.constant 0 : index
      %c0_28 = arith.constant 0 : index
      %31 = vector.load %arg7[%c0_27, %c0_28] : memref<8x1xf32, #tpu.memory_space<vmem>>, vector<8x1xf32>
      tpu.vector_store %arg7[%c0_27, %c0_28], %30 {strides = array<i32>} : memref<8x1xf32, #tpu.memory_space<vmem>>, vector<8x1xf32>,
    } else {
    }
    return
  }
  func.func @transform_0(%arg0: i32, %arg1: i32) -> (i32, i32) {
    %c0_i32 = arith.constant 0 : i32
    return %arg0, %arg1 : i32, i32
  }
  func.func @transform_1(%arg0: i32, %arg1: i32) -> (i32, i32) {
    %c0_i32 = arith.constant 0 : i32
    return %arg0, %arg1 : i32, i32
  }
  func.func @transform_2(%arg0: i32, %arg1: i32) -> (i32, i32) {
    %c0_i32 = arith.constant 0 : i32
    return %arg0, %arg1 : i32, i32
  }
  func.func @transform_3(%arg0: i32, %arg1: i32) -> (i32, i32) {
    %c0_i32 = arith.constant 0 : i32
    return %arg0, %arg1 : i32, i32
  }
  func.func @transform_4(%arg0: i32, %arg1: i32) -> (i32, i32) {
    %c0_i32 = arith.constant 0 : i32
    %c0_i32_0 = arith.constant 0 : i32
    return %arg0, %c0_i32 : i32, i32
  }
  func.func @transform_5(%arg0: i32, %arg1: i32) -> (i32, i32) {
    %c0_i32 = arith.constant 0 : i32
    %c0_i32_0 = arith.constant 0 : i32
    return %arg0, %c0_i32 : i32, i32
  }
}

</mosaic_0001>

<llo_original>
// kernel: loss_generative.1
$region0: #{loss_generative.1}
  #allocation0 [shape = 'u32[]', space=smem, size = 0x4, offset = 0x4, fixed_abs, tag = 'smem constant byte address 0x4 - core index']
  #allocation1 [shape = 'u32[144,128]{1,0:T(1,128)}', space=vmem, size = 0x12000, scoped, tag = 'internal scratch']
  #allocation2 [shape = 'f32[8,1]{1,0:T(8,128)}', space=vmem, size = 0x1000, scoped, tag = 'scratch operand']
  #allocation3 [shape = 'f32[8,1]{1,0:T(8,128)}', space=vmem, size = 0x1000, scoped, tag = 'scratch operand']
  %s0 = inlined_call_operand.vmem [shape: f32[16,128], index: 0, kind: input, shape index: {}]
  %s1 = inlined_call_operand.vmem [shape: f32[16,128], index: 1, kind: input, shape index: {}]
  %s2 = inlined_call_operand.vmem [shape: f32[16,128], index: 2, kind: input, shape index: {}]
  %s3 = inlined_call_operand.vmem [shape: f32[16,128], index: 3, kind: input, shape index: {}]
  %s4 = inlined_call_operand.vmem [shape: f32[16,1], index: 4, kind: output, shape index: {0}]
  %s5 = inlined_call_operand.vmem [shape: f32[16,1], index: 5, kind: output, shape index: {1}]
  %6 = xla_tuple %s4, %s5
  %s7 = sld [smem:[#allocation0]]
  $region65: #{loss_generative.1} parent=0
    _
  %s9 = ssub.s32 1, %s7
  %s10 = scalar_select 0, %s9, %s7
  loop: start=0, step=1, limit=4
  $region2: #{loss_generative.1} parent=0 // loop_pre_header
    _
  $region3: #{loss_generative.1} parent=0 // loop_header
    %s12 = sphi 0, %s16
    %p13 = scmp.ge.s32.totalorder %s12, 4
    %s19 = sphi 0, %s31
    %s20 = sphi 0, %s27
    %s21 = sphi 0, %s19
    %s22 = sphi 0, %s20
    %s23 = sphi 0, %s21
    %s24 = sphi 0, %s22
    %s36 = sphi 0, %s38
    %s39 = sphi 0, %s36
    %s40 = sphi 0, %s39
    %s56 = sphi 0, %s40
    %s64 = sphi 0, %s66
    %s67 = sphi 0, %s64
    %s68 = sphi 0, %s67
    %s84 = sphi 0, %s68
    %s92 = sphi 0, %s94
    %s95 = sphi 0, %s92
    %s96 = sphi 0, %s95
    %s112 = sphi 0, %s96
    %s120 = sphi 0, %s122
    %s123 = sphi 0, %s120
    %s124 = sphi 0, %s123
    %s140 = sphi 0, %s124
    %s146 = sphi 0, %s148
    %s149 = sphi 0, %s146
    %s150 = sphi 0, %s149
    %s166 = sphi 0, %s150
    %s172 = sphi 0, %s174
    %s175 = sphi 0, %s172
    %s176 = sphi 0, %s175
    %s192 = sphi 0, %s176
  $region4: #{loss_generative.1} parent=0 // loop_header_branch
    %15 = sbr.rel (%p13) target = $region8
  $region5: #{loss_generative.1} parent=0 // loop_body
    %s17 = ssub.s32 %s12, 1
    %s18 = ssub.s32 %s12, 2
    %s25 = sadd.s32 1, %s20
    %p26 = scmp.ge.s32.totalorder %s25, 1
    %s27 = scalar_select %p26, 0, %s25
    %s28 = sadd.s32 1, %s19
    %s29 = scalar_select %p26, %s28, %s19
    %p30 = scmp.ge.s32.totalorder %s29, 2
    %s31 = scalar_select %p30, 0, %s29
    %s32 = ssub.s32 %s19, %s31
    %s33 = ssub.s32 %s20, %s27
    %s34 = sor.u32 %s32, %s33
    %p35 = scmp.eq.s32.totalorder %s34, 0
    %s37 = sadd.s32 %s36, 1
    %s38 = scalar_select %p35, %s36, %s37
    %p41 = pneg %p35
    %p42 = scmp.eq.s32.totalorder %s12, 1
    %p43 = por %p41, %p42
    %p44 = scmp.ne.s32.totalorder %s36, %s39
    %p45 = scmp.eq.s32.totalorder %s12, 0
    %p46 = por %p44, %p45
    %p47 = scmp.ne.s32.totalorder %s36, %s39
    %p48 = scmp.eq.s32.totalorder %s17, 1
    %p49 = por %p47, %p48
    %p50 = scmp.ne.s32.totalorder %s39, %s40
    %p51 = scmp.eq.s32.totalorder %s17, 0
    %p52 = por %p50, %p51
    %p53 = scmp.ne.s32.totalorder %s39, %s40
    %p54 = scmp.eq.s32.totalorder %s18, 1
    %p55 = por %p53, %p54
    %p57 = scmp.ne.s32.totalorder %s40, %s56
    %p58 = scmp.eq.s32.totalorder %s18, 0
    %p59 = por %p57, %p58
    %s60 = ssub.s32 %s19, %s31
    %s61 = ssub.s32 %s20, %s27
    %s62 = sor.u32 %s60, %s61
    %p63 = scmp.eq.s32.totalorder %s62, 0
    %s65 = sadd.s32 %s64, 1
    %s66 = scalar_select %p63, %s64, %s65
    %p69 = pneg %p63
    %p70 = scmp.eq.s32.totalorder %s12, 1
    %p71 = por %p69, %p70
    %p72 = scmp.ne.s32.totalorder %s64, %s67
    %p73 = scmp.eq.s32.totalorder %s12, 0
    %p74 = por %p72, %p73
    %p75 = scmp.ne.s32.totalorder %s64, %s67
    %p76 = scmp.eq.s32.totalorder %s17, 1
    %p77 = por %p75, %p76
    %p78 = scmp.ne.s32.totalorder %s67, %s68
    %p79 = scmp.eq.s32.totalorder %s17, 0
    %p80 = por %p78, %p79
    %p81 = scmp.ne.s32.totalorder %s67, %s68
    %p82 = scmp.eq.s32.totalorder %s18, 1
    %p83 = por %p81, %p82
    %p85 = scmp.ne.s32.totalorder %s68, %s84
    %p86 = scmp.eq.s32.totalorder %s18, 0
    %p87 = por %p85, %p86
    %s88 = ssub.s32 %s19, %s31
    %s89 = ssub.s32 %s20, %s27
    %s90 = sor.u32 %s88, %s89
    %p91 = scmp.eq.s32.totalorder %s90, 0
    %s93 = sadd.s32 %s92, 1
    %s94 = scalar_select %p91, %s92, %s93
    %p97 = pneg %p91
    %p98 = scmp.eq.s32.totalorder %s12, 1
    %p99 = por %p97, %p98
    %p100 = scmp.ne.s32.totalorder %s92, %s95
    %p101 = scmp.eq.s32.totalorder %s12, 0
    %p102 = por %p100, %p101
    %p103 = scmp.ne.s32.totalorder %s92, %s95
    %p104 = scmp.eq.s32.totalorder %s17, 1
    %p105 = por %p103, %p104
    %p106 = scmp.ne.s32.totalorder %s95, %s96
    %p107 = scmp.eq.s32.totalorder %s17, 0
    %p108 = por %p106, %p107
    %p109 = scmp.ne.s32.totalorder %s95, %s96
    %p110 = scmp.eq.s32.totalorder %s18, 1
    %p111 = por %p109, %p110
    %p113 = scmp.ne.s32.totalorder %s96, %s112
    %p114 = scmp.eq.s32.totalorder %s18, 0
    %p115 = por %p113, %p114
    %s116 = ssub.s32 %s19, %s31
    %s117 = ssub.s32 %s20, %s27
    %s118 = sor.u32 %s116, %s117
    %p119 = scmp.eq.s32.totalorder %s118, 0
    %s121 = sadd.s32 %s120, 1
    %s122 = scalar_select %p119, %s120, %s121
    %p125 = pneg %p119
    %p126 = scmp.eq.s32.totalorder %s12, 1
    %p127 = por %p125, %p126
    %p128 = scmp.ne.s32.totalorder %s120, %s123
    %p129 = scmp.eq.s32.totalorder %s12, 0
    %p130 = por %p128, %p129
    %p131 = scmp.ne.s32.totalorder %s120, %s123
    %p132 = scmp.eq.s32.totalorder %s17, 1
    %p133 = por %p131, %p132
    %p134 = scmp.ne.s32.totalorder %s123, %s124
    %p135 = scmp.eq.s32.totalorder %s17, 0
    %p136 = por %p134, %p135
    %p137 = scmp.ne.s32.totalorder %s123, %s124
    %p138 = scmp.eq.s32.totalorder %s18, 1
    %p139 = por %p137, %p138
    %p141 = scmp.ne.s32.totalorder %s124, %s140
    %p142 = scmp.eq.s32.totalorder %s18, 0
    %p143 = por %p141, %p142
    %s144 = ssub.s32 %s19, %s31
    %p145 = scmp.eq.s32.totalorder %s144, 0
    %s147 = sadd.s32 %s146, 1
    %s148 = scalar_select %p145, %s146, %s147
    %p151 = pneg %p145
    %p152 = scmp.eq.s32.totalorder %s12, 1
    %p153 = por %p151, %p152
    %p154 = scmp.ne.s32.totalorder %s146, %s149
    %p155 = scmp.eq.s32.totalorder %s12, 0
    %p156 = por %p154, %p155
    %p157 = scmp.ne.s32.totalorder %s146, %s149
    %p158 = scmp.eq.s32.totalorder %s17, 1
    %p159 = por %p157, %p158
    %p160 = scmp.ne.s32.totalorder %s149, %s150
    %p161 = scmp.eq.s32.totalorder %s17, 0
    %p162 = por %p160, %p161
    %p163 = scmp.ne.s32.totalorder %s149, %s150
    %p164 = scmp.eq.s32.totalorder %s18, 1
    %p165 = por %p163, %p164
    %p167 = scmp.ne.s32.totalorder %s150, %s166
    %p168 = scmp.eq.s32.totalorder %s18, 0
    %p169 = por %p167, %p168
    %s170 = ssub.s32 %s19, %s31
    %p171 = scmp.eq.s32.totalorder %s170, 0
    %s173 = sadd.s32 %s172, 1
    %s174 = scalar_select %p171, %s172, %s173
    %p177 = pneg %p171
    %p178 = scmp.eq.s32.totalorder %s12, 1
    %p179 = por %p177, %p178
    %p180 = scmp.ne.s32.totalorder %s172, %s175
    %p181 = scmp.eq.s32.totalorder %s12, 0
    %p182 = por %p180, %p181
    %p183 = scmp.ne.s32.totalorder %s172, %s175
    %p184 = scmp.eq.s32.totalorder %s17, 1
    %p185 = por %p183, %p184
    %p186 = scmp.ne.s32.totalorder %s175, %s176
    %p187 = scmp.eq.s32.totalorder %s17, 0
    %p188 = por %p186, %p187
    %p189 = scmp.ne.s32.totalorder %s175, %s176
    %p190 = scmp.eq.s32.totalorder %s18, 1
    %p191 = por %p189, %p190
    %p193 = scmp.ne.s32.totalorder %s176, %s192
    %p194 = scmp.eq.s32.totalorder %s18, 0
    %p195 = por %p193, %p194
    %p196 = scmp.le.s32.totalorder 1, %s12
    %p197 = scmp.lt.s32.totalorder %s12, 3
    %p198 = pnand %p196, %p197
    %p199 = pneg %p198
    // Predicated region
    $region9: #{loss_generative.1} parent=5 // pred_check
      _
    $region10: #{loss_generative.1} parent=5 // pred_check_branch
      %201 = sbr.rel (%p198) target = $region12
    $region11: #{loss_generative.1} parent=5 // pred_region
      %s202 = ssub.s32 %s12, 1
    $region12: #{loss_generative.1} parent=5 // pred_fallthru
      _
    %p203 = scmp.lt.s32.totalorder %s12, 2
    // Predicated region
    $region13: #{loss_generative.1} parent=5 // pred_check
      %p204 = pneg %p203
    $region14: #{loss_generative.1} parent=5 // pred_check_branch
      %206 = sbr.rel (%p204) target = $region16
    $region15: #{loss_generative.1} parent=5 // pred_region
      // Predicated region
      $region17: #{loss_generative.1} parent=15 // pred_check
        %p207 = pneg %p46
      $region18: #{loss_generative.1} parent=15 // pred_check_branch
        %209 = sbr.rel (%p207) target = $region20
      $region19: #{loss_generative.1} parent=15 // pred_region
        %p210 = scmp.lt.s32.totalorder %s19, 1
        %s211 = scalar_select %p210, %s19, 1
        %p212 = scmp.lt.s32.totalorder %s20, 0
        %s213 = scalar_select %p212, %s20, 0
        %s214 = sadd.s32 %s213, %s211
        %s215 = smul.addr %s214, 8
        %s216 = scalar_lea.vmem %s0, %s215
      $region20: #{loss_generative.1} parent=15 // pred_fallthru
        _
      // Predicated region
      $region21: #{loss_generative.1} parent=15 // pred_check
        %p217 = pneg %p74
      $region22: #{loss_generative.1} parent=15 // pred_check_branch
        %219 = sbr.rel (%p217) target = $region24
      $region23: #{loss_generative.1} parent=15 // pred_region
        %p220 = scmp.lt.s32.totalorder %s19, 1
        %s221 = scalar_select %p220, %s19, 1
        %p222 = scmp.lt.s32.totalorder %s20, 0
        %s223 = scalar_select %p222, %s20, 0
        %s224 = sadd.s32 %s223, %s221
        %s225 = smul.addr %s224, 8
        %s226 = scalar_lea.vmem %s1, %s225
      $region24: #{loss_generative.1} parent=15 // pred_fallthru
        _
      // Predicated region
      $region25: #{loss_generative.1} parent=15 // pred_check
        %p227 = pneg %p102
      $region26: #{loss_generative.1} parent=15 // pred_check_branch
        %229 = sbr.rel (%p227) target = $region28
      $region27: #{loss_generative.1} parent=15 // pred_region
        %p230 = scmp.lt.s32.totalorder %s19, 1
        %s231 = scalar_select %p230, %s19, 1
        %p232 = scmp.lt.s32.totalorder %s20, 0
        %s233 = scalar_select %p232, %s20, 0
        %s234 = sadd.s32 %s233, %s231
        %s235 = smul.addr %s234, 8
        %s236 = scalar_lea.vmem %s2, %s235
      $region28: #{loss_generative.1} parent=15 // pred_fallthru
        _
      // Predicated region
      $region29: #{loss_generative.1} parent=15 // pred_check
        %p237 = pneg %p130
      $region30: #{loss_generative.1} parent=15 // pred_check_branch
        %239 = sbr.rel (%p237) target = $region32
      $region31: #{loss_generative.1} parent=15 // pred_region
        %p240 = scmp.lt.s32.totalorder %s19, 1
        %s241 = scalar_select %p240, %s19, 1
        %p242 = scmp.lt.s32.totalorder %s20, 0
        %s243 = scalar_select %p242, %s20, 0
        %s244 = sadd.s32 %s243, %s241
        %s245 = smul.addr %s244, 8
        %s246 = scalar_lea.vmem %s3, %s245
      $region32: #{loss_generative.1} parent=15 // pred_fallthru
        _
    $region16: #{loss_generative.1} parent=5 // pred_fallthru
      _
    %p247 = scmp.le.s32.totalorder 1, %s12
    %p248 = scmp.lt.s32.totalorder %s12, 3
    %p249 = pnand %p247, %p248
    %p250 = pneg %p249
    // Predicated region
    $region33: #{loss_generative.1} parent=5 // pred_check
      _
    $region34: #{loss_generative.1} parent=5 // pred_check_branch
      %252 = sbr.rel (%p249) target = $region36
    $region35: #{loss_generative.1} parent=5 // pred_region
      %s253 = ssub.s32 %s12, 1
      %p254 = scmp.lt.s32.totalorder %s21, 1
      %s255 = scalar_select %p254, %s21, 1
      %p256 = scmp.lt.s32.totalorder %s22, 0
      %s257 = scalar_select %p256, %s22, 0
      %s258 = sadd.s32 %s257, %s255
      %s259 = smul.addr %s258, 8
      %s260 = scalar_lea.vmem %s0, %s259
      %p261 = pneg %p52
      %p262 = pneg %p49
      %p263 = scmp.lt.s32.totalorder %s21, 1
      %s264 = scalar_select %p263, %s21, 1
      %p265 = scmp.lt.s32.totalorder %s22, 0
      %s266 = scalar_select %p265, %s22, 0
      %s267 = sadd.s32 %s266, %s264
      %s268 = smul.addr %s267, 8
      %s269 = scalar_lea.vmem %s1, %s268
      %p270 = pneg %p80
      %p271 = pneg %p77
      %p272 = scmp.lt.s32.totalorder %s21, 1
      %s273 = scalar_select %p272, %s21, 1
      %p274 = scmp.lt.s32.totalorder %s22, 0
      %s275 = scalar_select %p274, %s22, 0
      %s276 = sadd.s32 %s275, %s273
      %s277 = smul.addr %s276, 8
      %s278 = scalar_lea.vmem %s2, %s277
      %p279 = pneg %p108
      %p280 = pneg %p105
      %p281 = scmp.lt.s32.totalorder %s21, 1
      %s282 = scalar_select %p281, %s21, 1
      %p283 = scmp.lt.s32.totalorder %s22, 0
      %s284 = scalar_select %p283, %s22, 0
      %s285 = sadd.s32 %s284, %s282
      %s286 = smul.addr %s285, 8
      %s287 = scalar_lea.vmem %s3, %s286
      %p288 = pneg %p136
      %p289 = pneg %p133
      %p290 = pneg %p162
      %p291 = pneg %p159
      %p292 = scmp.lt.s32.totalorder %s21, 1
      %s293 = scalar_select %p292, %s21, 1
      %s294 = smul.addr %s293, 8
      %s295 = scalar_lea.vmem %s4, %s294
      %p296 = pneg %p188
      %p297 = pneg %p185
      %p298 = scmp.lt.s32.totalorder %s21, 1
      %s299 = scalar_select %p298, %s21, 1
      %s300 = smul.addr %s299, 8
      %s301 = scalar_lea.vmem %s5, %s300
      %p302 = scmp.lt.s32.totalorder %s21, 1
      %s303 = scalar_select %p302, %s21, 1
      %p304 = scmp.lt.s32.totalorder %s22, 0
      %s305 = scalar_select %p304, %s22, 0
      %s306 = sadd.s32 %s305, %s303
      %s307 = smul.addr %s306, 8
      %s308 = scalar_lea.vmem %s0, %s307
      %p309 = scmp.lt.s32.totalorder %s21, 1
      %s310 = scalar_select %p309, %s21, 1
      %p311 = scmp.lt.s32.totalorder %s22, 0
      %s312 = scalar_select %p311, %s22, 0
      %s313 = sadd.s32 %s312, %s310
      %s314 = smul.addr %s313, 8
      %s315 = scalar_lea.vmem %s1, %s314
      %p316 = scmp.lt.s32.totalorder %s21, 1
      %s317 = scalar_select %p316, %s21, 1
      %p318 = scmp.lt.s32.totalorder %s22, 0
      %s319 = scalar_select %p318, %s22, 0
      %s320 = sadd.s32 %s319, %s317
      %s321 = smul.addr %s320, 8
      %s322 = scalar_lea.vmem %s2, %s321
      %p323 = scmp.lt.s32.totalorder %s21, 1
      %s324 = scalar_select %p323, %s21, 1
      %p325 = scmp.lt.s32.totalorder %s22, 0
      %s326 = scalar_select %p325, %s22, 0
      %s327 = sadd.s32 %s326, %s324
      %s328 = smul.addr %s327, 8
      %s329 = scalar_lea.vmem %s3, %s328
      %p330 = scmp.lt.s32.totalorder %s21, 1
      %s331 = scalar_select %p330, %s21, 1
      %s332 = smul.addr %s331, 8
      %s333 = scalar_lea.vmem %s4, %s332
      %p334 = scmp.lt.s32.totalorder %s21, 1
      %s335 = scalar_select %p334, %s21, 1
      %s336 = smul.addr %s335, 8
      %s337 = scalar_lea.vmem %s5, %s336
      %p338 = scmp.eq.s32.totalorder %s22, 0
      // Predicated region
      $region37: #{loss_generative.1} parent=35 // pred_check
        %p339 = pneg %p338
      $region38: #{loss_generative.1} parent=35 // pred_check_branch
        %341 = sbr.rel (%p339) target = $region40
      $region39: #{loss_generative.1} parent=35 // pred_region
        %vm342 = vcmask 7168
        %343 = vst.msk [vmem:[#allocation2] sm:$0xff] %vm342, 0.0
        %344 = vst.msk [vmem:[#allocation3] sm:$0xff] %vm342, 0.0
      $region40: #{loss_generative.1} parent=35 // pred_fallthru
        _
      %v345 = vld [vmem:[%s308] sm:$0xff]
      %v346 = vld [vmem:[%s315] sm:$0xff]
      %v347 = vsub.f32 %v345, %v346
      %v348 = vadd.f32 %v347, 1e-06
      %v349 = vld [vmem:[%s322] sm:$0xff]
      %v350 = vld [vmem:[%s329] sm:$0xff]
      %v351 = vsub.f32 %v349, %v350
      %v352 = vadd.f32 %v351, 1e-06
      %v353 = vmul.f32 %v348, %v348
      %v354 = vmul.f32 %v352, %v352
      %v355 = vld [vmem:[#allocation2] sm:$0xff]
      %356 = vadd.xlane.f32.xlu0 %v353
      %v357 = vpop.xlane.xlu0 %356
      %v358 = vadd.f32 %v355, %v357
      %vm359 = vcmask 7168
      %360 = vst.msk [vmem:[#allocation2] sm:$0xff] %vm359, %v358
      %v361 = vld [vmem:[#allocation3] sm:$0xff]
      %362 = vadd.xlane.f32.xlu0 %v354
      %v363 = vpop.xlane.xlu0 %362
      %v364 = vadd.f32 %v361, %v363
      %365 = vst.msk [vmem:[#allocation3] sm:$0xff] %vm359, %v364
      // Predicated region
      $region41: #{loss_generative.1} parent=35 // pred_check
        %p366 = pneg %p338
      $region42: #{loss_generative.1} parent=35 // pred_check_branch
        %368 = sbr.rel (%p366) target = $region44
      $region43: #{loss_generative.1} parent=35 // pred_region
        %v369 = vld [vmem:[#allocation2] sm:$0xff]
        %370 = vst.msk [vmem:[%s333] sm:$0xff] %vm359, %v369
        %v371 = vld [vmem:[#allocation3] sm:$0xff]
        %372 = vst.msk [vmem:[%s337] sm:$0xff] %vm359, %v371
      $region44: #{loss_generative.1} parent=35 // pred_fallthru
        _
      %p373 = scmp.lt.s32.totalorder %s21, 1
      %s374 = scalar_select %p373, %s21, 1
      %s375 = smul.addr %s374, 8
      %s376 = scalar_lea.vmem %s4, %s375
      %p377 = scmp.lt.s32.totalorder %s21, 1
      %s378 = scalar_select %p377, %s21, 1
      %s379 = smul.addr %s378, 8
      %s380 = scalar_lea.vmem %s5, %s379
      // Predicated region
      $region45: #{loss_generative.1} parent=35 // pred_check
        %p381 = pneg %p159
      $region46: #{loss_generative.1} parent=35 // pred_check_branch
        %383 = sbr.rel (%p381) target = $region48
      $region47: #{loss_generative.1} parent=35 // pred_region
        _
      $region48: #{loss_generative.1} parent=35 // pred_fallthru
        _
      // Predicated region
      $region49: #{loss_generative.1} parent=35 // pred_check
        %p384 = pneg %p185
      $region50: #{loss_generative.1} parent=35 // pred_check_branch
        %386 = sbr.rel (%p384) target = $region52
      $region51: #{loss_generative.1} parent=35 // pred_region
        _
      $region52: #{loss_generative.1} parent=35 // pred_fallthru
        _
    $region36: #{loss_generative.1} parent=5 // pred_fallthru
      _
    %p387 = scmp.le.s32.totalorder 2, %s12
    // Predicated region
    $region53: #{loss_generative.1} parent=5 // pred_check
      %p388 = pneg %p387
    $region54: #{loss_generative.1} parent=5 // pred_check_branch
      %390 = sbr.rel (%p388) target = $region56
    $region55: #{loss_generative.1} parent=5 // pred_region
      %s391 = ssub.s32 %s12, 2
      // Predicated region
      $region57: #{loss_generative.1} parent=55 // pred_check
        %p392 = pneg %p165
      $region58: #{loss_generative.1} parent=55 // pred_check_branch
        %394 = sbr.rel (%p392) target = $region60
      $region59: #{loss_generative.1} parent=55 // pred_region
        %p395 = scmp.lt.s32.totalorder %s23, 1
        %s396 = scalar_select %p395, %s23, 1
        %s397 = smul.addr %s396, 8
        %s398 = scalar_lea.vmem %s4, %s397
      $region60: #{loss_generative.1} parent=55 // pred_fallthru
        _
      // Predicated region
      $region61: #{loss_generative.1} parent=55 // pred_check
        %p399 = pneg %p191
      $region62: #{loss_generative.1} parent=55 // pred_check_branch
        %401 = sbr.rel (%p399) target = $region64
      $region63: #{loss_generative.1} parent=55 // pred_region
        %p402 = scmp.lt.s32.totalorder %s23, 1
        %s403 = scalar_select %p402, %s23, 1
        %s404 = smul.addr %s403, 8
        %s405 = scalar_lea.vmem %s5, %s404
      $region64: #{loss_generative.1} parent=55 // pred_fallthru
        _
    $region56: #{loss_generative.1} parent=5 // pred_fallthru
      _
  $region6: #{loss_generative.1} parent=0 // loop_footer
    %s16 = sadd.s32 1, %s12
  $region7: #{loss_generative.1} parent=0 // loop_footer_branch
    %11 = sbr.rel target = $region3
  $region8: #{loss_generative.1} parent=0 // loop_exit
    _

</llo_original>
